<compile_context>
chip_gen: v5e
topology: v5e:2x2
jax: 0.10.0
libtpu: 0.0.40
codegen_flags: <defaults>
</compile_context>

<pallas_src>
import jax
import jax.numpy as jnp
import numpy as np
from jax.experimental import pallas as pl
from jax.experimental.pallas import tpu as pltpu


# --------------------------------------------------------------------------
# MaxUnpool2d(kernel_size=2, stride=2) — scatter-free mask formulation
# --------------------------------------------------------------------------
def unpool2x2_kernel(x_ref, idx_ref, o00_ref, o01_ref, o10_ref, o11_ref):
    """x_ref/idx_ref: (H, W, C);  o{dh}{dw}_ref: (H, W, C) with
       out[2h+dh, 2w+dw, c] = x[h, w, c] if idx[h, w, c] == (2h+dh)*2W + (2w+dw) else 0."""
    H, W, C = x_ref.shape
    x = x_ref[...]
    idx = idx_ref[...]
    hh = jax.lax.broadcasted_iota(jnp.int32, (H, W, C), 0)
    ww = jax.lax.broadcasted_iota(jnp.int32, (H, W, C), 1)
    outs = (o00_ref, o01_ref, o10_ref, o11_ref)
    for dh in range(2):
        for dw in range(2):
            tgt = (2 * hh + dh) * (2 * W) + (2 * ww + dw)
            outs[dh * 2 + dw][...] = jnp.where(idx == tgt, x, jnp.zeros_like(x))


def max_unpool2x2(x_nhwc, idx_nhwc):
    # TODO(synk): only indices produced by MaxPool2d(2,2) are supported (index must lie
    # inside its own 2x2 window); arbitrary MaxUnpool2d indices would need a true scatter.
    N, H, W, C = x_nhwc.shape
    io_spec = pl.BlockSpec((None, H, W, C), lambda n: (n, 0, 0, 0))
    outs = pl.pallas_call(
        unpool2x2_kernel,
        out_shape=tuple(jax.ShapeDtypeStruct((N, H, W, C), x_nhwc.dtype) for _ in range(4)),
        grid=(N,),
        in_specs=[io_spec, io_spec],
        out_specs=(io_spec, io_spec, io_spec, io_spec),
        compiler_params=pltpu.CompilerParams(dimension_semantics=("parallel",)),
    )(x_nhwc, idx_nhwc)
    # (dh, dw, N, H, W, C) -> (N, H, dh, W, dw, C) -> (N, 2H, 2W, C)   (cheap wrapper glue)
    up = jnp.stack(outs, axis=0).reshape(2, 2, N, H, W, C)
    return up.transpose(2, 3, 0, 4, 1, 5).reshape(N, 2 * H, 2 * W, C)


# --------------------------------------------------------------------------
# Phase A: Conv2d (as K banded MXU matmuls) + one-pass BN statistics
# --------------------------------------------------------------------------
def conv_stats_kernel(xpad_ref, wb_ref, y_ref, stats_ref):
    """xpad_ref:  (H+2p, (W+2p)*Cin)     full padded image, resident across row-tiles
       wb_ref:    (K, (W+2p)*Cin, W*Cout) block-banded weights, resident
       y_ref:     (TH, W*Cout)           conv output tile (lane-dense)
       stats_ref: (2, W*Cout)            per-tile [sum, sum-of-squares] over rows"""
    K = wb_ref.shape[0]
    TH, WCout = y_ref.shape
    row0 = pl.multiple_of(pl.program_id(1) * TH, TH)

    acc = jnp.zeros((TH, WCout), jnp.float32)
    for kh in range(K):  # K MXU matmuls; width taps are folded into the banded weight
        x_kh = xpad_ref[pl.ds(row0 + kh, TH), :]
        acc = acc + jnp.dot(x_kh, wb_ref[kh], preferred_element_type=jnp.float32)

    y_ref[...] = acc.astype(y_ref.dtype)
    s = jnp.sum(acc, axis=0, keepdims=True)
    ss = jnp.sum(acc * acc, axis=0, keepdims=True)
    stats_ref[...] = jnp.concatenate([s, ss], axis=0)


# --------------------------------------------------------------------------
# Phase B: BatchNorm affine (from global batch stats) + ReLU, lane-dense
# --------------------------------------------------------------------------
def affine_relu_kernel(y_ref, scale_ref, shift_ref, o_ref):
    o_ref[...] = jnp.maximum(y_ref[...] * scale_ref[...] + shift_ref[...], 0.0)


def _banded_weights(w, w_out):
    """w: (K, K, Cin, Cout) HWIO -> (K, (w_out+2p)*Cin, w_out*Cout) block-banded:
       wb[kh, wi*Cin+ci, wo*Cout+co] = w[kh, wi-wo, ci, co] if 0 <= wi-wo < K else 0."""
    K, _, cin, cout = w.shape
    p = K // 2
    wp = w_out + 2 * p
    sel = (np.arange(wp)[None, :, None]
           == np.arange(w_out)[None, None, :] + np.arange(K)[:, None, None])
    sel = jnp.asarray(sel.astype(np.float32))                  # (K, wp, w_out)
    wb = jnp.einsum("hkic,kwo->hwioc", w, sel)                 # (K, wp, Cin, w_out, Cout)
    return wb.reshape(K, wp * cin, w_out * cout)


def conv_bn_relu(x_nhwc, w, gamma, beta, *, tile_h=8, eps=1e-5):
    """Conv2d(padding=K//2, bias folded away) + BatchNorm2d(training-mode stats) + ReLU."""
    N, H, W, Cin = x_nhwc.shape
    K, _, _, Cout = w.shape
    p = K // 2
    Hp, Wp = H + 2 * p, W + 2 * p
    WCout = W * Cout
    TH = tile_h if H % tile_h == 0 else H
    nH = H // TH

    # wrapper glue: zero-pad once; flatten (W+2p, Cin) onto the lane axis (contiguous, free)
    xpad = jnp.pad(x_nhwc, ((0, 0), (p, p), (p, p), (0, 0))).reshape(N, Hp, Wp * Cin)
    wb = _banded_weights(w, W)

    cost = pl.CostEstimate(
        flops=2 * N * H * W * K * K * Cin * Cout,
        transcendentals=0,
        bytes_accessed=4 * (xpad.size + wb.size + N * H * WCout + N * nH * 2 * WCout),
    )

    y, stats = pl.pallas_call(
        conv_stats_kernel,
        out_shape=(
            jax.ShapeDtypeStruct((N, H, WCout), jnp.float32),
            jax.ShapeDtypeStruct((N, nH, 2, WCout), jnp.float32),
        ),
        grid=(N, nH),
        in_specs=[
            pl.BlockSpec((None, Hp, Wp * Cin), lambda n, h: (n, 0, 0)),   # fetched once per n
            pl.BlockSpec((K, Wp * Cin, WCout), lambda n, h: (0, 0, 0)),   # resident weights
        ],
        out_specs=(
            pl.BlockSpec((None, TH, WCout), lambda n, h: (n, h, 0)),
            pl.BlockSpec((None, None, 2, WCout), lambda n, h: (n, h, 0, 0)),
        ),
        compiler_params=pltpu.CompilerParams(
            dimension_semantics=("parallel", "parallel")),
        cost_estimate=cost,
    )(xpad, wb)

    # Tiny per-channel fold (wrapper glue): batch mean / biased var over N*H*W, eps=1e-5.
    M = N * H * W
    st = jnp.sum(stats, axis=(0, 1)).reshape(2, W, Cout).sum(axis=1)   # (2, Cout)
    mean = st[0] / M
    var = st[1] / M - mean * mean
    scale = gamma * jax.lax.rsqrt(var + eps)
    shift = beta - mean * scale
    scale_l = jnp.tile(scale, W).reshape(1, WCout)      # lane l = w*Cout + c
    shift_l = jnp.tile(shift, W).reshape(1, WCout)

    out = pl.pallas_call(
        affine_relu_kernel,
        out_shape=jax.ShapeDtypeStruct((N, H, WCout), jnp.float32),
        grid=(N, nH),
        in_specs=[
            pl.BlockSpec((None, TH, WCout), lambda n, h: (n, h, 0)),
            pl.BlockSpec((1, WCout), lambda n, h: (0, 0)),
            pl.BlockSpec((1, WCout), lambda n, h: (0, 0)),
        ],
        out_specs=pl.BlockSpec((None, TH, WCout), lambda n, h: (n, h, 0)),
        compiler_params=pltpu.CompilerParams(
            dimension_semantics=("parallel", "parallel")),
    )(y, scale_l, shift_l)

    return out.reshape(N, H, W, Cout)


# --------------------------------------------------------------------------
# DecoderBlockS
# --------------------------------------------------------------------------
class DecoderBlockSPallas:
    """Pallas port of DecoderBlockS: MaxUnpool2d(2,2) with stored indices, then
    nconvs x (Conv2d -> BatchNorm2d(train-mode forward) -> ReLU). Interface is NCHW."""

    def __init__(self, in_channels, out_channels, ksize, nconvs=2, key=None):
        self.in_channels = in_channels
        self.out_channels = out_channels
        self.kernel_size = ksize
        self.nconvs = nconvs
        self.idx = None
        if key is None:
            key = jax.random.PRNGKey(42)
        self.params = []
        cin = in_channels
        for i in range(nconvs):
            key, kw_, kb_ = jax.random.split(key, 3)
            fan_in = cin * ksize * ksize
            w = jax.random.normal(kw_, (ksize, ksize, cin, out_channels),
                                  jnp.float32) / np.sqrt(fan_in)
            b = 0.01 * jax.random.normal(kb_, (out_channels,), jnp.float32)
            gamma = jnp.full((out_channels,), 1.0 + 0.05 * i, jnp.float32)
            beta = jnp.full((out_channels,), 0.02 * (i + 1), jnp.float32)
            self.params.append((w, b, gamma, beta))
            cin = out_channels

    def setidx(self, idx):
        self.idx = idx

    def __call__(self, x_nchw):
        assert self.idx is not None, "call setidx(idx) before forward"
        x = jnp.transpose(x_nchw, (0, 2, 3, 1))                         # NCHW -> NHWC
        idx = jnp.transpose(self.idx, (0, 2, 3, 1)).astype(jnp.int32)
        x = max_unpool2x2(x, idx)
        for (w, b, gamma, beta) in self.params:
            # conv bias b is omitted in-kernel: it cancels exactly in training-mode BN
            x = conv_bn_relu(x, w, gamma, beta)
        # TODO(synk): BatchNorm running-stat buffer updates are not modeled (forward only).
        return jnp.transpose(x, (0, 3, 1, 2))                           # NHWC -> NCHW


# --------------------------------------------------------------------------
# Pure-JAX reference (independent implementation, for correctness checking)
# --------------------------------------------------------------------------
def reference_forward(block, x_nchw, idx_nchw):
    x = jnp.transpose(x_nchw, (0, 2, 3, 1))
    idx = jnp.transpose(idx_nchw, (0, 2, 3, 1)).astype(jnp.int32)
    N, H, W, C = x.shape
    Ho, Wo = 2 * H, 2 * W
    out = jnp.zeros((N, Ho * Wo, C), x.dtype)
    n_i = jnp.arange(N)[:, None, None]
    c_i = jnp.arange(C)[None, None, :]
    out = out.at[n_i, idx.reshape(N, H * W, C), c_i].set(x.reshape(N, H * W, C))
    x = out.reshape(N, Ho, Wo, C)
    for (w, b, gamma, beta) in block.params:
        y = jax.lax.conv_general_dilated(
            x, w, window_strides=(1, 1), padding="SAME",
            dimension_numbers=("NHWC", "HWIO", "NHWC"),
            precision=jax.lax.Precision.HIGHEST) + b.reshape(1, 1, 1, -1)
        mean = jnp.mean(y, axis=(0, 1, 2), keepdims=True)
        var = jnp.mean((y - mean) ** 2, axis=(0, 1, 2), keepdims=True)
        y = (y - mean) * jax.lax.rsqrt(var + 1e-5)
        y = y * gamma.reshape(1, 1, 1, -1) + beta.reshape(1, 1, 1, -1)
        x = jnp.maximum(y, 0.0)
    return jnp.transpose(x, (0, 3, 1, 2))


if __name__ == "__main__":
    key = jax.random.PRNGKey(0)
    kx, kdh, kdw = jax.random.split(key, 3)
    N, C, H, W = 2, 4, 8, 8                       # pooled feature map fed to the decoder
    x = jax.random.normal(kx, (N, C, H, W), jnp.float32)

    # Indices exactly as MaxPool2d(kernel_size=2, stride=2, return_indices=True) would
    # produce: one (flat) position inside each 2x2 window of the (2H, 2W) unpooled map.
    dh = jax.random.randint(kdh, (N, C, H, W), 0, 2)
    dw = jax.random.randint(kdw, (N, C, H, W), 0, 2)
    hh = jnp.arange(H).reshape(1, 1, H, 1)
    ww = jnp.arange(W).reshape(1, 1, 1, W)
    idx = ((2 * hh + dh) * (2 * W) + (2 * ww + dw)).astype(jnp.int32)

    block = DecoderBlockSPallas(in_channels=4, out_channels=8, ksize=3, nconvs=2,
                                key=jax.random.PRNGKey(1))
    block.setidx(idx)

    y = block(x)
    jax.block_until_ready(y)
    assert y.shape == (N, 8, 2 * H, 2 * W), y.shape

    y_ref = reference_forward(block, x, idx)
    np.testing.assert_allclose(np.asarray(y), np.asarray(y_ref),
                               rtol=2e-3, atol=2e-3)

    print("KERNEL_OK")
</pallas_src>

<mosaic_0001>
module attributes {stable_mosaic.version = 11 : i64} {
  func.func @unpool2x2_kernel(%arg0: i32, %arg1: memref<1x8x8x4xf32, #tpu.memory_space<vmem>>, %arg2: memref<1x8x8x4xi32, #tpu.memory_space<vmem>>, %arg3: memref<1x8x8x4xf32, #tpu.memory_space<vmem>>, %arg4: memref<1x8x8x4xf32, #tpu.memory_space<vmem>>, %arg5: memref<1x8x8x4xf32, #tpu.memory_space<vmem>>, %arg6: memref<1x8x8x4xf32, #tpu.memory_space<vmem>>) attributes {dimension_semantics = [#tpu.dimension_semantics<parallel>], iteration_bounds = array<i64: 2>, scalar_prefetch = 0 : i64, scratch_operands = 0 : i64, tpu.core_type = #tpu.core_type<tc>, window_params = [{transform_indices = @transform_0, window_bounds = array<i64: 1, 8, 8, 4>}, {transform_indices = @transform_1, window_bounds = array<i64: 1, 8, 8, 4>}, {transform_indices = @transform_2, window_bounds = array<i64: 1, 8, 8, 4>}, {transform_indices = @transform_3, window_bounds = array<i64: 1, 8, 8, 4>}, {transform_indices = @transform_4, window_bounds = array<i64: 1, 8, 8, 4>}, {transform_indices = @transform_5, window_bounds = array<i64: 1, 8, 8, 4>}]} {
    %c0 = arith.constant 0 : index
    %c0_0 = arith.constant 0 : index
    %c0_1 = arith.constant 0 : index
    %c0_2 = arith.constant 0 : index
    %0 = vector.load %arg1[%c0, %c0_0, %c0_1, %c0_2] : memref<1x8x8x4xf32, #tpu.memory_space<vmem>>, vector<1x8x8x4xf32>
    %1 = vector.shape_cast %0 : vector<1x8x8x4xf32> to vector<8x8x4xf32>
    %c0_3 = arith.constant 0 : index
    %c0_4 = arith.constant 0 : index
    %c0_5 = arith.constant 0 : index
    %c0_6 = arith.constant 0 : index
    %2 = vector.load %arg2[%c0_3, %c0_4, %c0_5, %c0_6] : memref<1x8x8x4xi32, #tpu.memory_space<vmem>>, vector<1x8x8x4xi32>
    %3 = vector.shape_cast %2 : vector<1x8x8x4xi32> to vector<8x8x4xi32>
    %4 = tpu.iota {dimensions = array<i32: 0>} : vector<8x8x4xi32>
    %5 = tpu.iota {dimensions = array<i32: 1>} : vector<8x8x4xi32>
    %c2_i32 = arith.constant 2 : i32
    %6 = vector.broadcast %c2_i32 : i32 to vector<8x8x4xi32>
    %7 = arith.muli %6, %4 : vector<8x8x4xi32>
    %c0_i32 = arith.constant 0 : i32
    %8 = vector.broadcast %c0_i32 : i32 to vector<8x8x4xi32>
    %9 = arith.addi %7, %8 : vector<8x8x4xi32>
    %c16_i32 = arith.constant 16 : i32
    %10 = vector.broadcast %c16_i32 : i32 to vector<8x8x4xi32>
    %11 = arith.muli %9, %10 : vector<8x8x4xi32>
    %c2_i32_7 = arith.constant 2 : i32
    %12 = vector.broadcast %c2_i32_7 : i32 to vector<8x8x4xi32>
    %13 = arith.muli %12, %5 : vector<8x8x4xi32>
    %c0_i32_8 = arith.constant 0 : i32
    %14 = vector.broadcast %c0_i32_8 : i32 to vector<8x8x4xi32>
    %15 = arith.addi %13, %14 : vector<8x8x4xi32>
    %16 = arith.addi %11, %15 : vector<8x8x4xi32>
    %17 = arith.cmpi eq, %3, %16 : vector<8x8x4xi32>
    %cst = arith.constant 0.000000e+00 : f32
    %18 = vector.broadcast %cst : f32 to vector<8x8x4xf32>
    %19 = arith.select %17, %1, %18 : vector<8x8x4xi1>, vector<8x8x4xf32>
    %c0_9 = arith.constant 0 : index
    %c0_10 = arith.constant 0 : index
    %c0_11 = arith.constant 0 : index
    %c0_12 = arith.constant 0 : index
    %20 = vector.load %arg3[%c0_9, %c0_10, %c0_11, %c0_12] : memref<1x8x8x4xf32, #tpu.memory_space<vmem>>, vector<1x8x8x4xf32>
    %21 = vector.shape_cast %20 : vector<1x8x8x4xf32> to vector<8x8x4xf32>
    %22 = vector.shape_cast %19 : vector<8x8x4xf32> to vector<1x8x8x4xf32>
    tpu.vector_store %arg3[%c0_9, %c0_10, %c0_11, %c0_12], %22 {strides = array<i32>} : memref<1x8x8x4xf32, #tpu.memory_space<vmem>>, vector<1x8x8x4xf32>,
    %c2_i32_13 = arith.constant 2 : i32
    %23 = vector.broadcast %c2_i32_13 : i32 to vector<8x8x4xi32>
    %24 = arith.muli %23, %4 : vector<8x8x4xi32>
    %c0_i32_14 = arith.constant 0 : i32
    %25 = vector.broadcast %c0_i32_14 : i32 to vector<8x8x4xi32>
    %26 = arith.addi %24, %25 : vector<8x8x4xi32>
    %c16_i32_15 = arith.constant 16 : i32
    %27 = vector.broadcast %c16_i32_15 : i32 to vector<8x8x4xi32>
    %28 = arith.muli %26, %27 : vector<8x8x4xi32>
    %c2_i32_16 = arith.constant 2 : i32
    %29 = vector.broadcast %c2_i32_16 : i32 to vector<8x8x4xi32>
    %30 = arith.muli %29, %5 : vector<8x8x4xi32>
    %c1_i32 = arith.constant 1 : i32
    %31 = vector.broadcast %c1_i32 : i32 to vector<8x8x4xi32>
    %32 = arith.addi %30, %31 : vector<8x8x4xi32>
    %33 = arith.addi %28, %32 : vector<8x8x4xi32>
    %34 = arith.cmpi eq, %3, %33 : vector<8x8x4xi32>
    %cst_17 = arith.constant 0.000000e+00 : f32
    %35 = vector.broadcast %cst_17 : f32 to vector<8x8x4xf32>
    %36 = arith.select %34, %1, %35 : vector<8x8x4xi1>, vector<8x8x4xf32>
    %c0_18 = arith.constant 0 : index
    %c0_19 = arith.constant 0 : index
    %c0_20 = arith.constant 0 : index
    %c0_21 = arith.constant 0 : index
    %37 = vector.load %arg4[%c0_18, %c0_19, %c0_20, %c0_21] : memref<1x8x8x4xf32, #tpu.memory_space<vmem>>, vector<1x8x8x4xf32>
    %38 = vector.shape_cast %37 : vector<1x8x8x4xf32> to vector<8x8x4xf32>
    %39 = vector.shape_cast %36 : vector<8x8x4xf32> to vector<1x8x8x4xf32>
    tpu.vector_store %arg4[%c0_18, %c0_19, %c0_20, %c0_21], %39 {strides = array<i32>} : memref<1x8x8x4xf32, #tpu.memory_space<vmem>>, vector<1x8x8x4xf32>,
    %c2_i32_22 = arith.constant 2 : i32
    %40 = vector.broadcast %c2_i32_22 : i32 to vector<8x8x4xi32>
    %41 = arith.muli %40, %4 : vector<8x8x4xi32>
    %c1_i32_23 = arith.constant 1 : i32
    %42 = vector.broadcast %c1_i32_23 : i32 to vector<8x8x4xi32>
    %43 = arith.addi %41, %42 : vector<8x8x4xi32>
    %c16_i32_24 = arith.constant 16 : i32
    %44 = vector.broadcast %c16_i32_24 : i32 to vector<8x8x4xi32>
    %45 = arith.muli %43, %44 : vector<8x8x4xi32>
    %c2_i32_25 = arith.constant 2 : i32
    %46 = vector.broadcast %c2_i32_25 : i32 to vector<8x8x4xi32>
    %47 = arith.muli %46, %5 : vector<8x8x4xi32>
    %c0_i32_26 = arith.constant 0 : i32
    %48 = vector.broadcast %c0_i32_26 : i32 to vector<8x8x4xi32>
    %49 = arith.addi %47, %48 : vector<8x8x4xi32>
    %50 = arith.addi %45, %49 : vector<8x8x4xi32>
    %51 = arith.cmpi eq, %3, %50 : vector<8x8x4xi32>
    %cst_27 = arith.constant 0.000000e+00 : f32
    %52 = vector.broadcast %cst_27 : f32 to vector<8x8x4xf32>
    %53 = arith.select %51, %1, %52 : vector<8x8x4xi1>, vector<8x8x4xf32>
    %c0_28 = arith.constant 0 : index
    %c0_29 = arith.constant 0 : index
    %c0_30 = arith.constant 0 : index
    %c0_31 = arith.constant 0 : index
    %54 = vector.load %arg5[%c0_28, %c0_29, %c0_30, %c0_31] : memref<1x8x8x4xf32, #tpu.memory_space<vmem>>, vector<1x8x8x4xf32>
    %55 = vector.shape_cast %54 : vector<1x8x8x4xf32> to vector<8x8x4xf32>
    %56 = vector.shape_cast %53 : vector<8x8x4xf32> to vector<1x8x8x4xf32>
    tpu.vector_store %arg5[%c0_28, %c0_29, %c0_30, %c0_31], %56 {strides = array<i32>} : memref<1x8x8x4xf32, #tpu.memory_space<vmem>>, vector<1x8x8x4xf32>,
    %c2_i32_32 = arith.constant 2 : i32
    %57 = vector.broadcast %c2_i32_32 : i32 to vector<8x8x4xi32>
    %58 = arith.muli %57, %4 : vector<8x8x4xi32>
    %c1_i32_33 = arith.constant 1 : i32
    %59 = vector.broadcast %c1_i32_33 : i32 to vector<8x8x4xi32>
    %60 = arith.addi %58, %59 : vector<8x8x4xi32>
    %c16_i32_34 = arith.constant 16 : i32
    %61 = vector.broadcast %c16_i32_34 : i32 to vector<8x8x4xi32>
    %62 = arith.muli %60, %61 : vector<8x8x4xi32>
    %c2_i32_35 = arith.constant 2 : i32
    %63 = vector.broadcast %c2_i32_35 : i32 to vector<8x8x4xi32>
    %64 = arith.muli %63, %5 : vector<8x8x4xi32>
    %c1_i32_36 = arith.constant 1 : i32
    %65 = vector.broadcast %c1_i32_36 : i32 to vector<8x8x4xi32>
    %66 = arith.addi %64, %65 : vector<8x8x4xi32>
    %67 = arith.addi %62, %66 : vector<8x8x4xi32>
    %68 = arith.cmpi eq, %3, %67 : vector<8x8x4xi32>
    %cst_37 = arith.constant 0.000000e+00 : f32
    %69 = vector.broadcast %cst_37 : f32 to vector<8x8x4xf32>
    %70 = arith.select %68, %1, %69 : vector<8x8x4xi1>, vector<8x8x4xf32>
    %c0_38 = arith.constant 0 : index
    %c0_39 = arith.constant 0 : index
    %c0_40 = arith.constant 0 : index
    %c0_41 = arith.constant 0 : index
    %71 = vector.load %arg6[%c0_38, %c0_39, %c0_40, %c0_41] : memref<1x8x8x4xf32, #tpu.memory_space<vmem>>, vector<1x8x8x4xf32>
    %72 = vector.shape_cast %71 : vector<1x8x8x4xf32> to vector<8x8x4xf32>
    %73 = vector.shape_cast %70 : vector<8x8x4xf32> to vector<1x8x8x4xf32>
    tpu.vector_store %arg6[%c0_38, %c0_39, %c0_40, %c0_41], %73 {strides = array<i32>} : memref<1x8x8x4xf32, #tpu.memory_space<vmem>>, vector<1x8x8x4xf32>,
    return
  }
  func.func @transform_0(%arg0: i32) -> (i32, i32, i32, i32) {
    %c0_i32 = arith.constant 0 : i32
    %c0_i32_0 = arith.constant 0 : i32
    %c0_i32_1 = arith.constant 0 : i32
    %c0_i32_2 = arith.constant 0 : i32
    return %arg0, %c0_i32, %c0_i32_0, %c0_i32_1 : i32, i32, i32, i32
  }
  func.func @transform_1(%arg0: i32) -> (i32, i32, i32, i32) {
    %c0_i32 = arith.constant 0 : i32
    %c0_i32_0 = arith.constant 0 : i32
    %c0_i32_1 = arith.constant 0 : i32
    %c0_i32_2 = arith.constant 0 : i32
    return %arg0, %c0_i32, %c0_i32_0, %c0_i32_1 : i32, i32, i32, i32
  }
  func.func @transform_2(%arg0: i32) -> (i32, i32, i32, i32) {
    %c0_i32 = arith.constant 0 : i32
    %c0_i32_0 = arith.constant 0 : i32
    %c0_i32_1 = arith.constant 0 : i32
    %c0_i32_2 = arith.constant 0 : i32
    return %arg0, %c0_i32, %c0_i32_0, %c0_i32_1 : i32, i32, i32, i32
  }
  func.func @transform_3(%arg0: i32) -> (i32, i32, i32, i32) {
    %c0_i32 = arith.constant 0 : i32
    %c0_i32_0 = arith.constant 0 : i32
    %c0_i32_1 = arith.constant 0 : i32
    %c0_i32_2 = arith.constant 0 : i32
    return %arg0, %c0_i32, %c0_i32_0, %c0_i32_1 : i32, i32, i32, i32
  }
  func.func @transform_4(%arg0: i32) -> (i32, i32, i32, i32) {
    %c0_i32 = arith.constant 0 : i32
    %c0_i32_0 = arith.constant 0 : i32
    %c0_i32_1 = arith.constant 0 : i32
    %c0_i32_2 = arith.constant 0 : i32
    return %arg0, %c0_i32, %c0_i32_0, %c0_i32_1 : i32, i32, i32, i32
  }
  func.func @transform_5(%arg0: i32) -> (i32, i32, i32, i32) {
    %c0_i32 = arith.constant 0 : i32
    %c0_i32_0 = arith.constant 0 : i32
    %c0_i32_1 = arith.constant 0 : i32
    %c0_i32_2 = arith.constant 0 : i32
    return %arg0, %c0_i32, %c0_i32_0, %c0_i32_1 : i32, i32, i32, i32
  }
}

</mosaic_0001>

<llo_original>
// kernel: tpu_custom_call.1
$region0: #{tpu_custom_call.1}
  #allocation0 [shape = 'u32[]', space=smem, size = 0x4, offset = 0x4, fixed_abs, tag = 'smem constant byte address 0x4 - core index']
  #allocation1 [shape = 'u32[72,128]{1,0:T(1,128)}', space=vmem, size = 0x9000, scoped, tag = 'internal scratch']
  %s0 = inlined_call_operand.vmem [shape: f32[2,8,8,4], index: 0, kind: input, shape index: {}]
  %s1 = inlined_call_operand.vmem [shape: s32[2,8,8,4], index: 1, kind: input, shape index: {}]
  %s2 = inlined_call_operand.vmem [shape: f32[2,8,8,4], index: 2, kind: output, shape index: {0}]
  %s3 = inlined_call_operand.vmem [shape: f32[2,8,8,4], index: 3, kind: output, shape index: {1}]
  %s4 = inlined_call_operand.vmem [shape: f32[2,8,8,4], index: 4, kind: output, shape index: {2}]
  %s5 = inlined_call_operand.vmem [shape: f32[2,8,8,4], index: 5, kind: output, shape index: {3}]
  %6 = xla_tuple %s2, %s3, %s4, %s5
  %s7 = sld [smem:[#allocation0]]
  $region65: #{tpu_custom_call.1} parent=0
    _
  %s9 = ssub.s32 1, %s7
  %s10 = scalar_select 0, %s9, %s7
  loop: start=0, step=1, limit=4
  $region2: #{tpu_custom_call.1} parent=0 // loop_pre_header
    _
  $region3: #{tpu_custom_call.1} parent=0 // loop_header
    %s12 = sphi 0, %s16
    %p13 = scmp.ge.s32.totalorder %s12, 4
    %s22 = sphi 0, %s24
    %s25 = sphi 0, %s22
    %s26 = sphi 0, %s25
    %s42 = sphi 0, %s26
    %s48 = sphi 0, %s50
    %s51 = sphi 0, %s48
    %s52 = sphi 0, %s51
    %s68 = sphi 0, %s52
    %s74 = sphi 0, %s76
    %s77 = sphi 0, %s74
    %s78 = sphi 0, %s77
    %s94 = sphi 0, %s78
    %s100 = sphi 0, %s102
    %s103 = sphi 0, %s100
    %s104 = sphi 0, %s103
    %s120 = sphi 0, %s104
    %s126 = sphi 0, %s128
    %s129 = sphi 0, %s126
    %s130 = sphi 0, %s129
    %s146 = sphi 0, %s130
    %s152 = sphi 0, %s154
    %s155 = sphi 0, %s152
    %s156 = sphi 0, %s155
    %s172 = sphi 0, %s156
  $region4: #{tpu_custom_call.1} parent=0 // loop_header_branch
    %15 = sbr.rel (%p13) target = $region8
  $region5: #{tpu_custom_call.1} parent=0 // loop_body
    %s17 = ssub.s32 %s12, 1
    %s18 = ssub.s32 %s12, 2
    %s19 = sadd.s32 %s12, 1
    %s20 = ssub.s32 %s12, %s19
    %p21 = scmp.eq.s32.totalorder %s20, 0
    %s23 = sadd.s32 %s22, 1
    %s24 = scalar_select %p21, %s22, %s23
    %p27 = pneg %p21
    %p28 = scmp.eq.s32.totalorder %s12, 1
    %p29 = por %p27, %p28
    %p30 = scmp.ne.s32.totalorder %s22, %s25
    %p31 = scmp.eq.s32.totalorder %s12, 0
    %p32 = por %p30, %p31
    %p33 = scmp.ne.s32.totalorder %s22, %s25
    %p34 = scmp.eq.s32.totalorder %s17, 1
    %p35 = por %p33, %p34
    %p36 = scmp.ne.s32.totalorder %s25, %s26
    %p37 = scmp.eq.s32.totalorder %s17, 0
    %p38 = por %p36, %p37
    %p39 = scmp.ne.s32.totalorder %s25, %s26
    %p40 = scmp.eq.s32.totalorder %s18, 1
    %p41 = por %p39, %p40
    %p43 = scmp.ne.s32.totalorder %s26, %s42
    %p44 = scmp.eq.s32.totalorder %s18, 0
    %p45 = por %p43, %p44
    %s46 = ssub.s32 %s12, %s19
    %p47 = scmp.eq.s32.totalorder %s46, 0
    %s49 = sadd.s32 %s48, 1
    %s50 = scalar_select %p47, %s48, %s49
    %p53 = pneg %p47
    %p54 = scmp.eq.s32.totalorder %s12, 1
    %p55 = por %p53, %p54
    %p56 = scmp.ne.s32.totalorder %s48, %s51
    %p57 = scmp.eq.s32.totalorder %s12, 0
    %p58 = por %p56, %p57
    %p59 = scmp.ne.s32.totalorder %s48, %s51
    %p60 = scmp.eq.s32.totalorder %s17, 1
    %p61 = por %p59, %p60
    %p62 = scmp.ne.s32.totalorder %s51, %s52
    %p63 = scmp.eq.s32.totalorder %s17, 0
    %p64 = por %p62, %p63
    %p65 = scmp.ne.s32.totalorder %s51, %s52
    %p66 = scmp.eq.s32.totalorder %s18, 1
    %p67 = por %p65, %p66
    %p69 = scmp.ne.s32.totalorder %s52, %s68
    %p70 = scmp.eq.s32.totalorder %s18, 0
    %p71 = por %p69, %p70
    %s72 = ssub.s32 %s12, %s19
    %p73 = scmp.eq.s32.totalorder %s72, 0
    %s75 = sadd.s32 %s74, 1
    %s76 = scalar_select %p73, %s74, %s75
    %p79 = pneg %p73
    %p80 = scmp.eq.s32.totalorder %s12, 1
    %p81 = por %p79, %p80
    %p82 = scmp.ne.s32.totalorder %s74, %s77
    %p83 = scmp.eq.s32.totalorder %s12, 0
    %p84 = por %p82, %p83
    %p85 = scmp.ne.s32.totalorder %s74, %s77
    %p86 = scmp.eq.s32.totalorder %s17, 1
    %p87 = por %p85, %p86
    %p88 = scmp.ne.s32.totalorder %s77, %s78
    %p89 = scmp.eq.s32.totalorder %s17, 0
    %p90 = por %p88, %p89
    %p91 = scmp.ne.s32.totalorder %s77, %s78
    %p92 = scmp.eq.s32.totalorder %s18, 1
    %p93 = por %p91, %p92
    %p95 = scmp.ne.s32.totalorder %s78, %s94
    %p96 = scmp.eq.s32.totalorder %s18, 0
    %p97 = por %p95, %p96
    %s98 = ssub.s32 %s12, %s19
    %p99 = scmp.eq.s32.totalorder %s98, 0
    %s101 = sadd.s32 %s100, 1
    %s102 = scalar_select %p99, %s100, %s101
    %p105 = pneg %p99
    %p106 = scmp.eq.s32.totalorder %s12, 1
    %p107 = por %p105, %p106
    %p108 = scmp.ne.s32.totalorder %s100, %s103
    %p109 = scmp.eq.s32.totalorder %s12, 0
    %p110 = por %p108, %p109
    %p111 = scmp.ne.s32.totalorder %s100, %s103
    %p112 = scmp.eq.s32.totalorder %s17, 1
    %p113 = por %p111, %p112
    %p114 = scmp.ne.s32.totalorder %s103, %s104
    %p115 = scmp.eq.s32.totalorder %s17, 0
    %p116 = por %p114, %p115
    %p117 = scmp.ne.s32.totalorder %s103, %s104
    %p118 = scmp.eq.s32.totalorder %s18, 1
    %p119 = por %p117, %p118
    %p121 = scmp.ne.s32.totalorder %s104, %s120
    %p122 = scmp.eq.s32.totalorder %s18, 0
    %p123 = por %p121, %p122
    %s124 = ssub.s32 %s12, %s19
    %p125 = scmp.eq.s32.totalorder %s124, 0
    %s127 = sadd.s32 %s126, 1
    %s128 = scalar_select %p125, %s126, %s127
    %p131 = pneg %p125
    %p132 = scmp.eq.s32.totalorder %s12, 1
    %p133 = por %p131, %p132
    %p134 = scmp.ne.s32.totalorder %s126, %s129
    %p135 = scmp.eq.s32.totalorder %s12, 0
    %p136 = por %p134, %p135
    %p137 = scmp.ne.s32.totalorder %s126, %s129
    %p138 = scmp.eq.s32.totalorder %s17, 1
    %p139 = por %p137, %p138
    %p140 = scmp.ne.s32.totalorder %s129, %s130
    %p141 = scmp.eq.s32.totalorder %s17, 0
    %p142 = por %p140, %p141
    %p143 = scmp.ne.s32.totalorder %s129, %s130
    %p144 = scmp.eq.s32.totalorder %s18, 1
    %p145 = por %p143, %p144
    %p147 = scmp.ne.s32.totalorder %s130, %s146
    %p148 = scmp.eq.s32.totalorder %s18, 0
    %p149 = por %p147, %p148
    %s150 = ssub.s32 %s12, %s19
    %p151 = scmp.eq.s32.totalorder %s150, 0
    %s153 = sadd.s32 %s152, 1
    %s154 = scalar_select %p151, %s152, %s153
    %p157 = pneg %p151
    %p158 = scmp.eq.s32.totalorder %s12, 1
    %p159 = por %p157, %p158
    %p160 = scmp.ne.s32.totalorder %s152, %s155
    %p161 = scmp.eq.s32.totalorder %s12, 0
    %p162 = por %p160, %p161
    %p163 = scmp.ne.s32.totalorder %s152, %s155
    %p164 = scmp.eq.s32.totalorder %s17, 1
    %p165 = por %p163, %p164
    %p166 = scmp.ne.s32.totalorder %s155, %s156
    %p167 = scmp.eq.s32.totalorder %s17, 0
    %p168 = por %p166, %p167
    %p169 = scmp.ne.s32.totalorder %s155, %s156
    %p170 = scmp.eq.s32.totalorder %s18, 1
    %p171 = por %p169, %p170
    %p173 = scmp.ne.s32.totalorder %s156, %s172
    %p174 = scmp.eq.s32.totalorder %s18, 0
    %p175 = por %p173, %p174
    %p176 = scmp.le.s32.totalorder 1, %s12
    %p177 = scmp.lt.s32.totalorder %s12, 3
    %p178 = pnand %p176, %p177
    %p179 = pneg %p178
    // Predicated region
    $region9: #{tpu_custom_call.1} parent=5 // pred_check
      _
    $region10: #{tpu_custom_call.1} parent=5 // pred_check_branch
      %181 = sbr.rel (%p178) target = $region12
    $region11: #{tpu_custom_call.1} parent=5 // pred_region
      %s182 = ssub.s32 %s12, 1
    $region12: #{tpu_custom_call.1} parent=5 // pred_fallthru
      _
    %p183 = scmp.lt.s32.totalorder %s12, 2
    // Predicated region
    $region13: #{tpu_custom_call.1} parent=5 // pred_check
      %p184 = pneg %p183
    $region14: #{tpu_custom_call.1} parent=5 // pred_check_branch
      %186 = sbr.rel (%p184) target = $region16
    $region15: #{tpu_custom_call.1} parent=5 // pred_region
      // Predicated region
      $region17: #{tpu_custom_call.1} parent=15 // pred_check
        %p187 = pneg %p32
      $region18: #{tpu_custom_call.1} parent=15 // pred_check_branch
        %189 = sbr.rel (%p187) target = $region20
      $region19: #{tpu_custom_call.1} parent=15 // pred_region
        %p190 = scmp.lt.s32.totalorder %s12, 1
        %s191 = scalar_select %p190, %s12, 1
        %s192 = smul.addr %s191, 8
        %s193 = smul.addr %s192, 8
        %s194 = scalar_lea.vmem %s0, %s193
      $region20: #{tpu_custom_call.1} parent=15 // pred_fallthru
        _
      // Predicated region
      $region21: #{tpu_custom_call.1} parent=15 // pred_check
        %p195 = pneg %p58
      $region22: #{tpu_custom_call.1} parent=15 // pred_check_branch
        %197 = sbr.rel (%p195) target = $region24
      $region23: #{tpu_custom_call.1} parent=15 // pred_region
        %p198 = scmp.lt.s32.totalorder %s12, 1
        %s199 = scalar_select %p198, %s12, 1
        %s200 = smul.addr %s199, 8
        %s201 = smul.addr %s200, 8
        %s202 = scalar_lea.vmem %s1, %s201
      $region24: #{tpu_custom_call.1} parent=15 // pred_fallthru
        _
    $region16: #{tpu_custom_call.1} parent=5 // pred_fallthru
      _
    %p203 = scmp.le.s32.totalorder 1, %s12
    %p204 = scmp.lt.s32.totalorder %s12, 3
    %p205 = pnand %p203, %p204
    %p206 = pneg %p205
    // Predicated region
    $region25: #{tpu_custom_call.1} parent=5 // pred_check
      _
    $region26: #{tpu_custom_call.1} parent=5 // pred_check_branch
      %208 = sbr.rel (%p205) target = $region28
    $region27: #{tpu_custom_call.1} parent=5 // pred_region
      %s209 = ssub.s32 %s12, 1
      %p210 = scmp.lt.s32.totalorder %s17, 1
      %s211 = scalar_select %p210, %s17, 1
      %s212 = smul.addr %s211, 8
      %s213 = smul.addr %s212, 8
      %s214 = scalar_lea.vmem %s0, %s213
      %p215 = pneg %p38
      %p216 = pneg %p35
      %p217 = scmp.lt.s32.totalorder %s17, 1
      %s218 = scalar_select %p217, %s17, 1
      %s219 = smul.addr %s218, 8
      %s220 = smul.addr %s219, 8
      %s221 = scalar_lea.vmem %s1, %s220
      %p222 = pneg %p64
      %p223 = pneg %p61
      %p224 = pneg %p90
      %p225 = pneg %p87
      %p226 = scmp.lt.s32.totalorder %s17, 1
      %s227 = scalar_select %p226, %s17, 1
      %s228 = smul.addr %s227, 8
      %s229 = smul.addr %s228, 8
      %s230 = scalar_lea.vmem %s2, %s229
      %p231 = pneg %p116
      %p232 = pneg %p113
      %p233 = scmp.lt.s32.totalorder %s17, 1
      %s234 = scalar_select %p233, %s17, 1
      %s235 = smul.addr %s234, 8
      %s236 = smul.addr %s235, 8
      %s237 = scalar_lea.vmem %s3, %s236
      %p238 = pneg %p142
      %p239 = pneg %p139
      %p240 = scmp.lt.s32.totalorder %s17, 1
      %s241 = scalar_select %p240, %s17, 1
      %s242 = smul.addr %s241, 8
      %s243 = smul.addr %s242, 8
      %s244 = scalar_lea.vmem %s4, %s243
      %p245 = pneg %p168
      %p246 = pneg %p165
      %p247 = scmp.lt.s32.totalorder %s17, 1
      %s248 = scalar_select %p247, %s17, 1
      %s249 = smul.addr %s248, 8
      %s250 = smul.addr %s249, 8
      %s251 = scalar_lea.vmem %s5, %s250
      %p252 = scmp.lt.s32.totalorder %s17, 1
      %s253 = scalar_select %p252, %s17, 1
      %s254 = smul.addr %s253, 8
      %s255 = smul.addr %s254, 8
      %s256 = scalar_lea.vmem %s0, %s255
      %p257 = scmp.lt.s32.totalorder %s17, 1
      %s258 = scalar_select %p257, %s17, 1
      %s259 = smul.addr %s258, 8
      %s260 = smul.addr %s259, 8
      %s261 = scalar_lea.vmem %s1, %s260
      %p262 = scmp.lt.s32.totalorder %s17, 1
      %s263 = scalar_select %p262, %s17, 1
      %s264 = smul.addr %s263, 8
      %s265 = smul.addr %s264, 8
      %s266 = scalar_lea.vmem %s2, %s265
      %p267 = scmp.lt.s32.totalorder %s17, 1
      %s268 = scalar_select %p267, %s17, 1
      %s269 = smul.addr %s268, 8
      %s270 = smul.addr %s269, 8
      %s271 = scalar_lea.vmem %s3, %s270
      %p272 = scmp.lt.s32.totalorder %s17, 1
      %s273 = scalar_select %p272, %s17, 1
      %s274 = smul.addr %s273, 8
      %s275 = smul.addr %s274, 8
      %s276 = scalar_lea.vmem %s4, %s275
      %p277 = scmp.lt.s32.totalorder %s17, 1
      %s278 = scalar_select %p277, %s17, 1
      %s279 = smul.addr %s278, 8
      %s280 = smul.addr %s279, 8
      %s281 = scalar_lea.vmem %s5, %s280
      %v282 = vld [vmem:[%s256] sm:$0xff]
      %v283 = vld [vmem:[%s256 + $0x8] sm:$0xff]
      %v284 = vld [vmem:[%s256 + $0x10] sm:$0xff]
      %v285 = vld [vmem:[%s256 + $0x18] sm:$0xff]
      %v286 = vld [vmem:[%s256 + $0x20] sm:$0xff]
      %v287 = vld [vmem:[%s256 + $0x28] sm:$0xff]
      %v288 = vld [vmem:[%s256 + $0x30] sm:$0xff]
      %v289 = vld [vmem:[%s256 + $0x38] sm:$0xff]
      %v290 = vld [vmem:[%s261] sm:$0xff]
      %v291 = vld [vmem:[%s261 + $0x8] sm:$0xff]
      %v292 = vld [vmem:[%s261 + $0x10] sm:$0xff]
      %v293 = vld [vmem:[%s261 + $0x18] sm:$0xff]
      %v294 = vld [vmem:[%s261 + $0x20] sm:$0xff]
      %v295 = vld [vmem:[%s261 + $0x28] sm:$0xff]
      %v296 = vld [vmem:[%s261 + $0x30] sm:$0xff]
      %v297 = vld [vmem:[%s261 + $0x38] sm:$0xff]
      %v298 = vlaneseq
      %v299 = vshrl.u32 %v298, 7
      %v300 = vmul.u32 %v299, 2
      %v301 = vadd.s32 %v300, 32
      %v302 = vadd.s32 %v300, 64
      %v303 = vadd.s32 %v300, 96
      %v304 = vadd.s32 %v300, 128
      %v305 = vadd.s32 %v300, 160
      %v306 = vadd.s32 %v300, 192
      %v307 = vadd.s32 %v300, 224
      %vm308 = vcmp.eq.s32.totalorder %v290, %v300
      %vm309 = vcmp.eq.s32.totalorder %v291, %v301
      %vm310 = vcmp.eq.s32.totalorder %v292, %v302
      %vm311 = vcmp.eq.s32.totalorder %v293, %v303
      %vm312 = vcmp.eq.s32.totalorder %v294, %v304
      %vm313 = vcmp.eq.s32.totalorder %v295, %v305
      %vm314 = vcmp.eq.s32.totalorder %v296, %v306
      %vm315 = vcmp.eq.s32.totalorder %v297, %v307
      %v316 = vsel %vm308, %v282, 0.0
      %v317 = vsel %vm309, %v283, 0.0
      %v318 = vsel %vm310, %v284, 0.0
      %v319 = vsel %vm311, %v285, 0.0
      %v320 = vsel %vm312, %v286, 0.0
      %v321 = vsel %vm313, %v287, 0.0
      %v322 = vsel %vm314, %v288, 0.0
      %v323 = vsel %vm315, %v289, 0.0
      %vm324 = vcmask 31744
      %325 = vst.msk [vmem:[%s266] sm:$0xff] %vm324, %v316
      %326 = vst.msk [vmem:[%s266 + $0x8] sm:$0xff] %vm324, %v317
      %327 = vst.msk [vmem:[%s266 + $0x10] sm:$0xff] %vm324, %v318
      %328 = vst.msk [vmem:[%s266 + $0x18] sm:$0xff] %vm324, %v319
      %329 = vst.msk [vmem:[%s266 + $0x20] sm:$0xff] %vm324, %v320
      %330 = vst.msk [vmem:[%s266 + $0x28] sm:$0xff] %vm324, %v321
      %331 = vst.msk [vmem:[%s266 + $0x30] sm:$0xff] %vm324, %v322
      %332 = vst.msk [vmem:[%s266 + $0x38] sm:$0xff] %vm324, %v323
      %v333 = vadd.s32 %v300, 1
      %v334 = vadd.s32 %v333, 32
      %v335 = vadd.s32 %v333, 64
      %v336 = vadd.s32 %v333, 96
      %v337 = vadd.s32 %v333, 128
      %v338 = vadd.s32 %v333, 160
      %v339 = vadd.s32 %v333, 192
      %v340 = vadd.s32 %v333, 224
      %vm341 = vcmp.eq.s32.totalorder %v290, %v333
      %vm342 = vcmp.eq.s32.totalorder %v291, %v334
      %vm343 = vcmp.eq.s32.totalorder %v292, %v335
      %vm344 = vcmp.eq.s32.totalorder %v293, %v336
      %vm345 = vcmp.eq.s32.totalorder %v294, %v337
      %vm346 = vcmp.eq.s32.totalorder %v295, %v338
      %vm347 = vcmp.eq.s32.totalorder %v296, %v339
      %vm348 = vcmp.eq.s32.totalorder %v297, %v340
      %v349 = vsel %vm341, %v282, 0.0
      %v350 = vsel %vm342, %v283, 0.0
      %v351 = vsel %vm343, %v284, 0.0
      %v352 = vsel %vm344, %v285, 0.0
      %v353 = vsel %vm345, %v286, 0.0
      %v354 = vsel %vm346, %v287, 0.0
      %v355 = vsel %vm347, %v288, 0.0
      %v356 = vsel %vm348, %v289, 0.0
      %357 = vst.msk [vmem:[%s271] sm:$0xff] %vm324, %v349
      %358 = vst.msk [vmem:[%s271 + $0x8] sm:$0xff] %vm324, %v350
      %359 = vst.msk [vmem:[%s271 + $0x10] sm:$0xff] %vm324, %v351
      %360 = vst.msk [vmem:[%s271 + $0x18] sm:$0xff] %vm324, %v352
      %361 = vst.msk [vmem:[%s271 + $0x20] sm:$0xff] %vm324, %v353
      %362 = vst.msk [vmem:[%s271 + $0x28] sm:$0xff] %vm324, %v354
      %363 = vst.msk [vmem:[%s271 + $0x30] sm:$0xff] %vm324, %v355
      %364 = vst.msk [vmem:[%s271 + $0x38] sm:$0xff] %vm324, %v356
      %v365 = vadd.s32 %v300, 16
      %v366 = vadd.s32 %v300, 48
      %v367 = vadd.s32 %v300, 80
      %v368 = vadd.s32 %v300, 112
      %v369 = vadd.s32 %v300, 144
      %v370 = vadd.s32 %v300, 176
      %v371 = vadd.s32 %v300, 208
      %v372 = vadd.s32 %v300, 240
      %vm373 = vcmp.eq.s32.totalorder %v290, %v365
      %vm374 = vcmp.eq.s32.totalorder %v291, %v366
      %vm375 = vcmp.eq.s32.totalorder %v292, %v367
      %vm376 = vcmp.eq.s32.totalorder %v293, %v368
      %vm377 = vcmp.eq.s32.totalorder %v294, %v369
      %vm378 = vcmp.eq.s32.totalorder %v295, %v370
      %vm379 = vcmp.eq.s32.totalorder %v296, %v371
      %vm380 = vcmp.eq.s32.totalorder %v297, %v372
      %v381 = vsel %vm373, %v282, 0.0
      %v382 = vsel %vm374, %v283, 0.0
      %v383 = vsel %vm375, %v284, 0.0
      %v384 = vsel %vm376, %v285, 0.0
      %v385 = vsel %vm377, %v286, 0.0
      %v386 = vsel %vm378, %v287, 0.0
      %v387 = vsel %vm379, %v288, 0.0
      %v388 = vsel %vm380, %v289, 0.0
      %389 = vst.msk [vmem:[%s276] sm:$0xff] %vm324, %v381
      %390 = vst.msk [vmem:[%s276 + $0x8] sm:$0xff] %vm324, %v382
      %391 = vst.msk [vmem:[%s276 + $0x10] sm:$0xff] %vm324, %v383
      %392 = vst.msk [vmem:[%s276 + $0x18] sm:$0xff] %vm324, %v384
      %393 = vst.msk [vmem:[%s276 + $0x20] sm:$0xff] %vm324, %v385
      %394 = vst.msk [vmem:[%s276 + $0x28] sm:$0xff] %vm324, %v386
      %395 = vst.msk [vmem:[%s276 + $0x30] sm:$0xff] %vm324, %v387
      %396 = vst.msk [vmem:[%s276 + $0x38] sm:$0xff] %vm324, %v388
      %v397 = vadd.s32 %v333, 16
      %v398 = vadd.s32 %v333, 48
      %v399 = vadd.s32 %v333, 80
      %v400 = vadd.s32 %v333, 112
      %v401 = vadd.s32 %v333, 144
      %v402 = vadd.s32 %v333, 176
      %v403 = vadd.s32 %v333, 208
      %v404 = vadd.s32 %v333, 240
      %vm405 = vcmp.eq.s32.totalorder %v290, %v397
      %vm406 = vcmp.eq.s32.totalorder %v291, %v398
      %vm407 = vcmp.eq.s32.totalorder %v292, %v399
      %vm408 = vcmp.eq.s32.totalorder %v293, %v400
      %vm409 = vcmp.eq.s32.totalorder %v294, %v401
      %vm410 = vcmp.eq.s32.totalorder %v295, %v402
      %vm411 = vcmp.eq.s32.totalorder %v296, %v403
      %vm412 = vcmp.eq.s32.totalorder %v297, %v404
      %v413 = vsel %vm405, %v282, 0.0
      %v414 = vsel %vm406, %v283, 0.0
      %v415 = vsel %vm407, %v284, 0.0
      %v416 = vsel %vm408, %v285, 0.0
      %v417 = vsel %vm409, %v286, 0.0
      %v418 = vsel %vm410, %v287, 0.0
      %v419 = vsel %vm411, %v288, 0.0
      %v420 = vsel %vm412, %v289, 0.0
      %421 = vst.msk [vmem:[%s281] sm:$0xff] %vm324, %v413
      %422 = vst.msk [vmem:[%s281 + $0x8] sm:$0xff] %vm324, %v414
      %423 = vst.msk [vmem:[%s281 + $0x10] sm:$0xff] %vm324, %v415
      %424 = vst.msk [vmem:[%s281 + $0x18] sm:$0xff] %vm324, %v416
      %425 = vst.msk [vmem:[%s281 + $0x20] sm:$0xff] %vm324, %v417
      %426 = vst.msk [vmem:[%s281 + $0x28] sm:$0xff] %vm324, %v418
      %427 = vst.msk [vmem:[%s281 + $0x30] sm:$0xff] %vm324, %v419
      %428 = vst.msk [vmem:[%s281 + $0x38] sm:$0xff] %vm324, %v420
      %p429 = scmp.lt.s32.totalorder %s17, 1
      %s430 = scalar_select %p429, %s17, 1
      %s431 = smul.addr %s430, 8
      %s432 = smul.addr %s431, 8
      %s433 = scalar_lea.vmem %s2, %s432
      %p434 = scmp.lt.s32.totalorder %s17, 1
      %s435 = scalar_select %p434, %s17, 1
      %s436 = smul.addr %s435, 8
      %s437 = smul.addr %s436, 8
      %s438 = scalar_lea.vmem %s3, %s437
      %p439 = scmp.lt.s32.totalorder %s17, 1
      %s440 = scalar_select %p439, %s17, 1
      %s441 = smul.addr %s440, 8
      %s442 = smul.addr %s441, 8
      %s443 = scalar_lea.vmem %s4, %s442
      %p444 = scmp.lt.s32.totalorder %s17, 1
      %s445 = scalar_select %p444, %s17, 1
      %s446 = smul.addr %s445, 8
      %s447 = smul.addr %s446, 8
      %s448 = scalar_lea.vmem %s5, %s447
      // Predicated region
      $region29: #{tpu_custom_call.1} parent=27 // pred_check
        %p449 = pneg %p87
      $region30: #{tpu_custom_call.1} parent=27 // pred_check_branch
        %451 = sbr.rel (%p449) target = $region32
      $region31: #{tpu_custom_call.1} parent=27 // pred_region
        _
      $region32: #{tpu_custom_call.1} parent=27 // pred_fallthru
        _
      // Predicated region
      $region33: #{tpu_custom_call.1} parent=27 // pred_check
        %p452 = pneg %p113
      $region34: #{tpu_custom_call.1} parent=27 // pred_check_branch
        %454 = sbr.rel (%p452) target = $region36
      $region35: #{tpu_custom_call.1} parent=27 // pred_region
        _
      $region36: #{tpu_custom_call.1} parent=27 // pred_fallthru
        _
      // Predicated region
      $region37: #{tpu_custom_call.1} parent=27 // pred_check
        %p455 = pneg %p139
      $region38: #{tpu_custom_call.1} parent=27 // pred_check_branch
        %457 = sbr.rel (%p455) target = $region40
      $region39: #{tpu_custom_call.1} parent=27 // pred_region
        _
      $region40: #{tpu_custom_call.1} parent=27 // pred_fallthru
        _
      // Predicated region
      $region41: #{tpu_custom_call.1} parent=27 // pred_check
        %p458 = pneg %p165
      $region42: #{tpu_custom_call.1} parent=27 // pred_check_branch
        %460 = sbr.rel (%p458) target = $region44
      $region43: #{tpu_custom_call.1} parent=27 // pred_region
        _
      $region44: #{tpu_custom_call.1} parent=27 // pred_fallthru
        _
    $region28: #{tpu_custom_call.1} parent=5 // pred_fallthru
      _
    %p461 = scmp.le.s32.totalorder 2, %s12
    // Predicated region
    $region45: #{tpu_custom_call.1} parent=5 // pred_check
      %p462 = pneg %p461
    $region46: #{tpu_custom_call.1} parent=5 // pred_check_branch
      %464 = sbr.rel (%p462) target = $region48
    $region47: #{tpu_custom_call.1} parent=5 // pred_region
      %s465 = ssub.s32 %s12, 2
      // Predicated region
      $region49: #{tpu_custom_call.1} parent=47 // pred_check
        %p466 = pneg %p93
      $region50: #{tpu_custom_call.1} parent=47 // pred_check_branch
        %468 = sbr.rel (%p466) target = $region52
      $region51: #{tpu_custom_call.1} parent=47 // pred_region
        %p469 = scmp.lt.s32.totalorder %s18, 1
        %s470 = scalar_select %p469, %s18, 1
        %s471 = smul.addr %s470, 8
        %s472 = smul.addr %s471, 8
        %s473 = scalar_lea.vmem %s2, %s472
      $region52: #{tpu_custom_call.1} parent=47 // pred_fallthru
        _
      // Predicated region
      $region53: #{tpu_custom_call.1} parent=47 // pred_check
        %p474 = pneg %p119
      $region54: #{tpu_custom_call.1} parent=47 // pred_check_branch
        %476 = sbr.rel (%p474) target = $region56
      $region55: #{tpu_custom_call.1} parent=47 // pred_region
        %p477 = scmp.lt.s32.totalorder %s18, 1
        %s478 = scalar_select %p477, %s18, 1
        %s479 = smul.addr %s478, 8
        %s480 = smul.addr %s479, 8
        %s481 = scalar_lea.vmem %s3, %s480
      $region56: #{tpu_custom_call.1} parent=47 // pred_fallthru
        _
      // Predicated region
      $region57: #{tpu_custom_call.1} parent=47 // pred_check
        %p482 = pneg %p145
      $region58: #{tpu_custom_call.1} parent=47 // pred_check_branch
        %484 = sbr.rel (%p482) target = $region60
      $region59: #{tpu_custom_call.1} parent=47 // pred_region
        %p485 = scmp.lt.s32.totalorder %s18, 1
        %s486 = scalar_select %p485, %s18, 1
        %s487 = smul.addr %s486, 8
        %s488 = smul.addr %s487, 8
        %s489 = scalar_lea.vmem %s4, %s488
      $region60: #{tpu_custom_call.1} parent=47 // pred_fallthru
        _
      // Predicated region
      $region61: #{tpu_custom_call.1} parent=47 // pred_check
        %p490 = pneg %p171
      $region62: #{tpu_custom_call.1} parent=47 // pred_check_branch
        %492 = sbr.rel (%p490) target = $region64
      $region63: #{tpu_custom_call.1} parent=47 // pred_region
        %p493 = scmp.lt.s32.totalorder %s18, 1
        %s494 = scalar_select %p493, %s18, 1
        %s495 = smul.addr %s494, 8
        %s496 = smul.addr %s495, 8
        %s497 = scalar_lea.vmem %s5, %s496
      $region64: #{tpu_custom_call.1} parent=47 // pred_fallthru
        _
    $region48: #{tpu_custom_call.1} parent=5 // pred_fallthru
      _
  $region6: #{tpu_custom_call.1} parent=0 // loop_footer
    %s16 = sadd.s32 1, %s12
  $region7: #{tpu_custom_call.1} parent=0 // loop_footer_branch
    %11 = sbr.rel target = $region3
  $region8: #{tpu_custom_call.1} parent=0 // loop_exit
    _

</llo_original>
